<compile_context>
chip_gen: v6e
topology: v6e:2x2x1
jax: 0.10.0
libtpu: 0.0.40
codegen_flags: <defaults>
</compile_context>

<pallas_src>
import functools

import jax
import jax.numpy as jnp
from jax.experimental import pallas as pl
from jax.experimental.pallas import tpu as pltpu

HIDDEN = 64
LANE = 128
MAX_TILE_B = 512


def _round_up(n, m):
    return ((n + m - 1) // m) * m


def _pick_tile_b(batch):
    """Batch tile: multiple of 8 sublanes, <= 512, bounded padding waste."""
    b8 = _round_up(max(batch, 1), 8)
    if b8 <= MAX_TILE_B:
        return b8                      # whole (padded) batch in one grid step
    # Large batch: biggest tile whose row-padding waste stays <= ~12.5%.
    for cand in (512, 256, 128, 64, 32, 16, 8):
        if _round_up(batch, cand) - batch <= max(batch // 8, 8):
            return cand
    return 8


# ----------------------------- kernels --------------------------------------


def _backbone(x, w1, b1, w2, b2):
    """Linear -> tanh -> Linear -> tanh, f32 activations, bf16 MXU inputs."""
    h1 = jnp.tanh(jnp.dot(x, w1, preferred_element_type=jnp.float32) + b1)
    h2 = jnp.tanh(
        jnp.dot(h1.astype(jnp.bfloat16), w2,
                preferred_element_type=jnp.float32) + b2)
    return h2


def _discrete_policy_kernel(x_ref, w1_ref, b1_ref, w2_ref, b2_ref,
                            w3_ref, b3_ref, probs_ref):
    h2 = _backbone(x_ref[...], w1_ref[...], b1_ref[...],
                   w2_ref[...], b2_ref[...])
    logits = (jnp.dot(h2.astype(jnp.bfloat16), w3_ref[...],
                      preferred_element_type=jnp.float32) + b3_ref[...])
    # Padded logit lanes carry bias -1e30 -> exp underflows to 0, zero mass.
    m = jnp.max(logits, axis=-1, keepdims=True)
    e = jnp.exp(logits - m)
    denom = jnp.sum(e, axis=-1, keepdims=True)
    probs_ref[...] = e * pl.reciprocal(denom, approx=True)


def _continuous_policy_kernel(x_ref, w1_ref, b1_ref, w2_ref, b2_ref,
                              wm_ref, bm_ref, mean_ref):
    h2 = _backbone(x_ref[...], w1_ref[...], b1_ref[...],
                   w2_ref[...], b2_ref[...])
    mean_ref[...] = (jnp.dot(h2.astype(jnp.bfloat16), wm_ref[...],
                             preferred_element_type=jnp.float32) + bm_ref[...])
    # std = exp(log_std) is batch-independent: computed in the wrapper.


# --------------------------- pallas_call wrappers ----------------------------


def _head_pallas_call(kernel, xp, weights_and_biases, tile_b):
    """Shared batch-tiled pallas_call for either head."""
    b_pad, in_pad = xp.shape
    hid_pad = weights_and_biases[0].shape[1]
    out_pad = weights_and_biases[-2].shape[1]   # last weight: (hid, out_pad)
    grid = (b_pad // tile_b,)

    in_specs = [pl.BlockSpec((tile_b, in_pad), lambda i: (i, 0))]
    for arr in weights_and_biases:
        r, c = arr.shape
        in_specs.append(pl.BlockSpec((r, c), lambda i: (0, 0)))

    flops = 2 * b_pad * (in_pad * hid_pad + hid_pad * hid_pad
                         + hid_pad * out_pad)
    transcendentals = b_pad * (2 * hid_pad + out_pad)
    bytes_accessed = (xp.size * xp.dtype.itemsize
                      + sum(a.size * a.dtype.itemsize
                            for a in weights_and_biases)
                      + b_pad * out_pad * 4)

    return pl.pallas_call(
        kernel,
        out_shape=jax.ShapeDtypeStruct((b_pad, out_pad), jnp.float32),
        grid=grid,
        in_specs=in_specs,
        out_specs=pl.BlockSpec((tile_b, out_pad), lambda i: (i, 0)),
        compiler_params=pltpu.CompilerParams(
            dimension_semantics=("parallel",)),
        cost_estimate=pl.CostEstimate(flops=flops,
                                      transcendentals=transcendentals,
                                      bytes_accessed=bytes_accessed),
    )(xp, *weights_and_biases)


def _pad_x(x, b_pad, in_pad):
    B, in_dim = x.shape
    xp = jnp.zeros((b_pad, in_pad), jnp.bfloat16)
    return xp.at[:B, :in_dim].set(x.astype(jnp.bfloat16))


@functools.partial(jax.jit, static_argnames=("out_dim",))
def policy_forward_discrete(x, padded_params, out_dim):
    """x: (B, input_dim) or (input_dim,) f32 -> action_probs (B, out_dim)."""
    p = padded_params
    squeeze = (x.ndim == 1)
    if squeeze:
        x = x[None, :]
    B = x.shape[0]
    in_pad = p["w1"].shape[0]
    tile_b = _pick_tile_b(B)
    b_pad = _round_up(B, tile_b)
    xp = _pad_x(x, b_pad, in_pad)
    probs_pad = _head_pallas_call(
        _discrete_policy_kernel, xp,
        (p["w1"], p["b1"], p["w2"], p["b2"], p["w3"], p["b3"]), tile_b)
    probs = probs_pad[:B, :out_dim]
    return probs[0] if squeeze else probs


@functools.partial(jax.jit, static_argnames=("out_dim",))
def policy_forward_continuous(x, padded_params, out_dim):
    """x -> (mean: (B, out_dim), std: (out_dim,))."""
    p = padded_params
    squeeze = (x.ndim == 1)
    if squeeze:
        x = x[None, :]
    B = x.shape[0]
    in_pad = p["w1"].shape[0]
    tile_b = _pick_tile_b(B)
    b_pad = _round_up(B, tile_b)
    xp = _pad_x(x, b_pad, in_pad)
    mean_pad = _head_pallas_call(
        _continuous_policy_kernel, xp,
        (p["w1"], p["b1"], p["w2"], p["b2"], p["w_mean"], p["b_mean"]),
        tile_b)
    mean = mean_pad[:B, :out_dim]
    std = jnp.exp(p["log_std"])          # batch-independent: done outside
    return (mean[0] if squeeze else mean), std


# ------------------------- parameter construction ---------------------------


def init_params(key, input_dim, output_dim, continuous=False):
    """Logical (unpadded) params mirroring nn.Linear init (+/- 1/sqrt(fan_in)).

    Weights are (in_features, out_features); biases are (1, out)."""
    def linear(k, fan_in, fan_out):
        kw, kb = jax.random.split(k)
        bound = 1.0 / jnp.sqrt(jnp.float32(fan_in))
        w = jax.random.uniform(kw, (fan_in, fan_out), jnp.float32,
                               -bound, bound)
        b = jax.random.uniform(kb, (1, fan_out), jnp.float32, -bound, bound)
        return w, b

    k1, k2, k3 = jax.random.split(key, 3)
    w1, b1 = linear(k1, input_dim, HIDDEN)
    w2, b2 = linear(k2, HIDDEN, HIDDEN)
    params = {"w1": w1, "b1": b1, "w2": w2, "b2": b2}
    if continuous:
        wm, bm = linear(k3, HIDDEN, output_dim)
        params.update({
            "w_mean": wm, "b_mean": bm,
            "log_std": jnp.zeros((output_dim,), jnp.float32),
        })
    else:
        w3, b3 = linear(k3, HIDDEN, output_dim)
        params.update({"w3": w3, "b3": b3})
    return params


def pad_params(params, input_dim, output_dim, continuous=False):
    """Lane-pad params once (outside the forward): weights->bf16, dims->128x."""
    in_pad = _round_up(max(input_dim, 1), LANE)
    hid_pad = _round_up(HIDDEN, LANE)
    out_pad = _round_up(max(output_dim, 1), LANE)

    def pad_w(w, rows, cols):
        out = jnp.zeros((rows, cols), jnp.float32)
        out = out.at[:w.shape[0], :w.shape[1]].set(w)
        return out.astype(jnp.bfloat16)

    def pad_b(b, cols, fill=0.0):
        out = jnp.full((1, cols), fill, jnp.float32)
        return out.at[:, :b.shape[1]].set(b)

    padded = {
        "w1": pad_w(params["w1"], in_pad, hid_pad),
        "b1": pad_b(params["b1"], hid_pad),
        "w2": pad_w(params["w2"], hid_pad, hid_pad),
        "b2": pad_b(params["b2"], hid_pad),
    }
    if continuous:
        padded["w_mean"] = pad_w(params["w_mean"], hid_pad, out_pad)
        padded["b_mean"] = pad_b(params["b_mean"], out_pad)
        padded["log_std"] = params["log_std"]
    else:
        # padded logit columns get -1e30 bias -> zero softmax probability
        padded["w3"] = pad_w(params["w3"], hid_pad, out_pad)
        padded["b3"] = pad_b(params["b3"], out_pad, fill=-1e30)
    return padded


# pure-JAX f32 reference (same math, no Pallas) for correctness checks
def _ref_discrete(x, p):
    h = jnp.tanh(x @ p["w1"] + p["b1"])
    h = jnp.tanh(h @ p["w2"] + p["b2"])
    return jax.nn.softmax(h @ p["w3"] + p["b3"], axis=-1)


def _ref_continuous(x, p):
    h = jnp.tanh(x @ p["w1"] + p["b1"])
    h = jnp.tanh(h @ p["w2"] + p["b2"])
    return h @ p["w_mean"] + p["b_mean"], jnp.exp(p["log_std"])


# TODO(synk): get_action's Categorical/Normal sampling + log_prob is host-side
# distribution logic, not part of the fused forward kernel.


if __name__ == "__main__":
    key = jax.random.PRNGKey(0)
    k_param, k_param_c, k_x = jax.random.split(key, 3)

    batch, input_dim, output_dim = 2, 8, 4
    x = jax.random.normal(k_x, (batch, input_dim), jnp.float32)

    # --- discrete head (default: continuous=False) ---
    params_d = init_params(k_param, input_dim, output_dim, continuous=False)
    padded_d = pad_params(params_d, input_dim, output_dim, continuous=False)
    probs = policy_forward_discrete(x, padded_d, out_dim=output_dim)
    probs = jax.block_until_ready(probs)

    ref = _ref_discrete(x, params_d)
    assert probs.shape == (batch, output_dim)
    # approx reciprocal + bf16 matmuls -> slightly looser tolerances
    assert jnp.allclose(jnp.sum(probs, axis=-1), 1.0, atol=1e-3)
    assert jnp.allclose(probs, ref, atol=2e-2)

    # single-state (1-D) path, mirroring get_action's per-state forward
    probs1 = jax.block_until_ready(
        policy_forward_discrete(x[0], padded_d, out_dim=output_dim))
    assert probs1.shape == (output_dim,)
    assert jnp.allclose(probs1, ref[0], atol=2e-2)

    # --- continuous head ---
    params_c = init_params(k_param_c, input_dim, output_dim, continuous=True)
    padded_c = pad_params(params_c, input_dim, output_dim, continuous=True)
    mean, std = policy_forward_continuous(x, padded_c, out_dim=output_dim)
    mean = jax.block_until_ready(mean)
    std = jax.block_until_ready(std)

    ref_mean, ref_std = _ref_continuous(x, params_c)
    assert mean.shape == (batch, output_dim)
    assert std.shape == (output_dim,)
    assert jnp.allclose(mean, ref_mean, atol=2e-2)
    assert jnp.allclose(std, ref_std, atol=1e-6)   # exp(zeros) == 1

    print("KERNEL_OK")
</pallas_src>

<mosaic_0001>
module attributes {stable_mosaic.version = 11 : i64} {
  func.func @_discrete_policy_kernel(%arg0: i32, %arg1: memref<8x128xbf16, #tpu.memory_space<vmem>>, %arg2: memref<128x128xbf16, #tpu.memory_space<vmem>>, %arg3: memref<1x128xf32, #tpu.memory_space<vmem>>, %arg4: memref<128x128xbf16, #tpu.memory_space<vmem>>, %arg5: memref<1x128xf32, #tpu.memory_space<vmem>>, %arg6: memref<128x128xbf16, #tpu.memory_space<vmem>>, %arg7: memref<1x128xf32, #tpu.memory_space<vmem>>, %arg8: memref<8x128xf32, #tpu.memory_space<vmem>>) attributes {dimension_semantics = [#tpu.dimension_semantics<parallel>], iteration_bounds = array<i64: 1>, scalar_prefetch = 0 : i64, scratch_operands = 0 : i64, tpu.core_type = #tpu.core_type<tc>, window_params = [{transform_indices = @transform_0, window_bounds = array<i64: 8, 128>}, {pipeline_mode = #tpu.pipeline_mode<synchronous>, transform_indices = @transform_1, window_bounds = array<i64: 128, 128>}, {pipeline_mode = #tpu.pipeline_mode<synchronous>, transform_indices = @transform_2, window_bounds = array<i64: 1, 128>}, {pipeline_mode = #tpu.pipeline_mode<synchronous>, transform_indices = @transform_3, window_bounds = array<i64: 128, 128>}, {pipeline_mode = #tpu.pipeline_mode<synchronous>, transform_indices = @transform_4, window_bounds = array<i64: 1, 128>}, {pipeline_mode = #tpu.pipeline_mode<synchronous>, transform_indices = @transform_5, window_bounds = array<i64: 128, 128>}, {pipeline_mode = #tpu.pipeline_mode<synchronous>, transform_indices = @transform_6, window_bounds = array<i64: 1, 128>}, {transform_indices = @transform_7, window_bounds = array<i64: 8, 128>}]} {
    %c0 = arith.constant 0 : index
    %c0_0 = arith.constant 0 : index
    %0 = vector.load %arg1[%c0, %c0_0] : memref<8x128xbf16, #tpu.memory_space<vmem>>, vector<8x128xbf16>
    %c0_1 = arith.constant 0 : index
    %c0_2 = arith.constant 0 : index
    %1 = vector.load %arg2[%c0_1, %c0_2] : memref<128x128xbf16, #tpu.memory_space<vmem>>, vector<128x128xbf16>
    %c0_3 = arith.constant 0 : index
    %c0_4 = arith.constant 0 : index
    %2 = vector.load %arg3[%c0_3, %c0_4] : memref<1x128xf32, #tpu.memory_space<vmem>>, vector<1x128xf32>
    %c0_5 = arith.constant 0 : index
    %c0_6 = arith.constant 0 : index
    %3 = vector.load %arg4[%c0_5, %c0_6] : memref<128x128xbf16, #tpu.memory_space<vmem>>, vector<128x128xbf16>
    %c0_7 = arith.constant 0 : index
    %c0_8 = arith.constant 0 : index
    %4 = vector.load %arg5[%c0_7, %c0_8] : memref<1x128xf32, #tpu.memory_space<vmem>>, vector<1x128xf32>
    %cst = arith.constant dense<0.000000e+00> : vector<8x128xf32>
    %5 = tpu.matmul %0, %1, %cst {dimension_numbers = #tpu.dot_dimension_numbers<[1], [0], [0], [1], [0, 0, 1, 1], [], []>} : vector<8x128xbf16>, vector<128x128xbf16>, vector<8x128xf32> -> vector<8x128xf32>
    %6 = vector.broadcast %2 : vector<1x128xf32> to vector<8x128xf32>
    %7 = arith.addf %5, %6 : vector<8x128xf32>
    %8 = math.tanh %7 : vector<8x128xf32>
    %9 = arith.truncf %8 : vector<8x128xf32> to vector<8x128xbf16>
    %cst_9 = arith.constant dense<0.000000e+00> : vector<8x128xf32>
    %10 = tpu.matmul %9, %3, %cst_9 {dimension_numbers = #tpu.dot_dimension_numbers<[1], [0], [0], [1], [0, 0, 1, 1], [], []>} : vector<8x128xbf16>, vector<128x128xbf16>, vector<8x128xf32> -> vector<8x128xf32>
    %11 = vector.broadcast %4 : vector<1x128xf32> to vector<8x128xf32>
    %12 = arith.addf %10, %11 : vector<8x128xf32>
    %13 = math.tanh %12 : vector<8x128xf32>
    %14 = arith.truncf %13 : vector<8x128xf32> to vector<8x128xbf16>
    %c0_10 = arith.constant 0 : index
    %c0_11 = arith.constant 0 : index
    %15 = vector.load %arg6[%c0_10, %c0_11] : memref<128x128xbf16, #tpu.memory_space<vmem>>, vector<128x128xbf16>
    %cst_12 = arith.constant dense<0.000000e+00> : vector<8x128xf32>
    %16 = tpu.matmul %14, %15, %cst_12 {dimension_numbers = #tpu.dot_dimension_numbers<[1], [0], [0], [1], [0, 0, 1, 1], [], []>} : vector<8x128xbf16>, vector<128x128xbf16>, vector<8x128xf32> -> vector<8x128xf32>
    %c0_13 = arith.constant 0 : index
    %c0_14 = arith.constant 0 : index
    %17 = vector.load %arg7[%c0_13, %c0_14] : memref<1x128xf32, #tpu.memory_space<vmem>>, vector<1x128xf32>
    %18 = vector.broadcast %17 : vector<1x128xf32> to vector<8x128xf32>
    %19 = arith.addf %16, %18 : vector<8x128xf32>
    %cst_15 = arith.constant dense<0xFF800000> : vector<8xf32>
    %20 = vector.multi_reduction <maximumf>, %19, %cst_15 [1] : vector<8x128xf32> to vector<8xf32>
    %21 = vector.shape_cast %20 : vector<8xf32> to vector<8x1xf32>
    %22 = vector.broadcast %21 : vector<8x1xf32> to vector<8x128xf32>
    %23 = arith.subf %19, %22 : vector<8x128xf32>
    %24 = math.exp %23 : vector<8x128xf32>
    %cst_16 = arith.constant dense<0.000000e+00> : vector<8xf32>
    %25 = vector.multi_reduction <add>, %24, %cst_16 [1] : vector<8x128xf32> to vector<8xf32>
    %26 = vector.shape_cast %25 : vector<8xf32> to vector<8x1xf32>
    %27 = tpu.reciprocal %26 {approx = true} : vector<8x1xf32> -> vector<8x1xf32>
    %28 = vector.broadcast %27 : vector<8x1xf32> to vector<8x128xf32>
    %29 = arith.mulf %24, %28 : vector<8x128xf32>
    %c0_17 = arith.constant 0 : index
    %c0_18 = arith.constant 0 : index
    %30 = vector.load %arg8[%c0_17, %c0_18] : memref<8x128xf32, #tpu.memory_space<vmem>>, vector<8x128xf32>
    tpu.vector_store %arg8[%c0_17, %c0_18], %29 {strides = array<i32>} : memref<8x128xf32, #tpu.memory_space<vmem>>, vector<8x128xf32>,
    return
  }
  func.func @transform_0(%arg0: i32) -> (i32, i32) {
    %c0_i32 = arith.constant 0 : i32
    %c0_i32_0 = arith.constant 0 : i32
    return %arg0, %c0_i32 : i32, i32
  }
  func.func @transform_1(%arg0: i32) -> (i32, i32) {
    %c0_i32 = arith.constant 0 : i32
    %c0_i32_0 = arith.constant 0 : i32
    %c0_i32_1 = arith.constant 0 : i32
    return %c0_i32, %c0_i32_0 : i32, i32
  }
  func.func @transform_2(%arg0: i32) -> (i32, i32) {
    %c0_i32 = arith.constant 0 : i32
    %c0_i32_0 = arith.constant 0 : i32
    %c0_i32_1 = arith.constant 0 : i32
    return %c0_i32, %c0_i32_0 : i32, i32
  }
  func.func @transform_3(%arg0: i32) -> (i32, i32) {
    %c0_i32 = arith.constant 0 : i32
    %c0_i32_0 = arith.constant 0 : i32
    %c0_i32_1 = arith.constant 0 : i32
    return %c0_i32, %c0_i32_0 : i32, i32
  }
  func.func @transform_4(%arg0: i32) -> (i32, i32) {
    %c0_i32 = arith.constant 0 : i32
    %c0_i32_0 = arith.constant 0 : i32
    %c0_i32_1 = arith.constant 0 : i32
    return %c0_i32, %c0_i32_0 : i32, i32
  }
  func.func @transform_5(%arg0: i32) -> (i32, i32) {
    %c0_i32 = arith.constant 0 : i32
    %c0_i32_0 = arith.constant 0 : i32
    %c0_i32_1 = arith.constant 0 : i32
    return %c0_i32, %c0_i32_0 : i32, i32
  }
  func.func @transform_6(%arg0: i32) -> (i32, i32) {
    %c0_i32 = arith.constant 0 : i32
    %c0_i32_0 = arith.constant 0 : i32
    %c0_i32_1 = arith.constant 0 : i32
    return %c0_i32, %c0_i32_0 : i32, i32
  }
  func.func @transform_7(%arg0: i32) -> (i32, i32) {
    %c0_i32 = arith.constant 0 : i32
    %c0_i32_0 = arith.constant 0 : i32
    return %arg0, %c0_i32 : i32, i32
  }
}

</mosaic_0001>

<llo_original>
// kernel: policy_forward_discrete.1
$region0: #{policy_forward_discrete.1}
  #allocation0 [shape = 'u32[]', space=smem, size = 0x4, offset = 0x4, fixed_abs, tag = 'smem constant byte address 0x4 - core index']
  #allocation1 [shape = 'u32[144,128]{1,0:T(1,128)}', space=vmem, size = 0x12000, scoped, tag = 'internal scratch']
  %s0 = inlined_call_operand.vmem [shape: bf16[8,128], index: 0, kind: input, shape index: {}]
  %s1 = inlined_call_operand.hbm [shape: bf16[128,128], index: 1, kind: input, shape index: {}]
  %s2 = inlined_call_operand.vmem [shape: f32[1,128], index: 2, kind: input, shape index: {}]
  %s3 = inlined_call_operand.hbm [shape: bf16[128,128], index: 3, kind: input, shape index: {}]
  %s4 = inlined_call_operand.vmem [shape: f32[1,128], index: 4, kind: input, shape index: {}]
  %s5 = inlined_call_operand.hbm [shape: bf16[128,128], index: 5, kind: input, shape index: {}]
  %s6 = inlined_call_operand.vmem [shape: f32[1,128], index: 6, kind: input, shape index: {}]
  %s7 = inlined_call_operand.vmem [shape: f32[8,128], index: 7, kind: output, shape index: {}]
  %s8 = sld [smem:[#allocation0]]
  $region50: #{policy_forward_discrete.1} parent=0
    _
  %s10 = ssub.s32 1, %s8
  %s11 = scalar_select 0, %s10, %s8
  $region1: #{policy_forward_discrete.1} parent=0
    #allocation2 [shape = 'u8[32768]{0}', space=vmem, size = 0x8000, scoped, tag = 'input window, operand 1, single buffered']
    #allocation3 [shape = 's32[1]{0}', space=sflag, size = 0x4, scoped, tag = 'scoped memory for policy_forward_discrete.1']
    #allocation4 [shape = 'u8[32768]{0}', space=vmem, size = 0x8000, scoped, tag = 'input window, operand 3, single buffered']
    #allocation5 [shape = 's32[1]{0}', space=sflag, size = 0x4, scoped, tag = 'scoped memory for policy_forward_discrete.1']
    #allocation6 [shape = 'u8[32768]{0}', space=vmem, size = 0x8000, scoped, tag = 'input window, operand 5, single buffered']
    %12 = vsyncpa [#allocation3], 0
    %13 = vsyncpa [#allocation5], 0
    // Predicated region
    $region2: #{policy_forward_discrete.1} parent=1 // pred_check
      _
    $region3: #{policy_forward_discrete.1} parent=1 // pred_check_branch
      %15 = sbr.rel (0) target = $region5
    $region4: #{policy_forward_discrete.1} parent=1 // pred_region
      _
    $region5: #{policy_forward_discrete.1} parent=1 // pred_fallthru
      _
    // Predicated region
    $region6: #{policy_forward_discrete.1} parent=1 // pred_check
      _
    $region7: #{policy_forward_discrete.1} parent=1 // pred_check_branch
      %17 = sbr.rel (0) target = $region9
    $region8: #{policy_forward_discrete.1} parent=1 // pred_region
      %s19 = ssub.s32 1024, 1024
      %20 = vsyncadd [#allocation3], %s19
      %s21 = sshll.u32 [#allocation2], 4
      %s22 = int_to_ptr.vmem [resolvable:$true] %s21
      %27 = dma.hbm_to_vmem [thread:$0]  %s1, 1024, %s22, [#allocation3], 64, 64, 4
    $region9: #{policy_forward_discrete.1} parent=1 // pred_fallthru
      _
    // Predicated region
    $region10: #{policy_forward_discrete.1} parent=1 // pred_check
      _
    $region11: #{policy_forward_discrete.1} parent=1 // pred_check_branch
      %29 = sbr.rel (0) target = $region13
    $region12: #{policy_forward_discrete.1} parent=1 // pred_region
      _
    $region13: #{policy_forward_discrete.1} parent=1 // pred_fallthru
      _
    // Predicated region
    $region14: #{policy_forward_discrete.1} parent=1 // pred_check
      _
    $region15: #{policy_forward_discrete.1} parent=1 // pred_check_branch
      %31 = sbr.rel (0) target = $region17
    $region16: #{policy_forward_discrete.1} parent=1 // pred_region
      %s33 = ssub.s32 1024, 1024
      %34 = vsyncadd [#allocation5], %s33
      %s35 = sshll.u32 [#allocation4], 4
      %s36 = int_to_ptr.vmem [resolvable:$true] %s35
      %41 = dma.hbm_to_vmem [thread:$0]  %s3, 1024, %s36, [#allocation5], 64, 64, 4
    $region17: #{policy_forward_discrete.1} parent=1 // pred_fallthru
      _
    // Predicated region
    $region18: #{policy_forward_discrete.1} parent=1 // pred_check
      _
    $region19: #{policy_forward_discrete.1} parent=1 // pred_check_branch
      %43 = sbr.rel (0) target = $region21
    $region20: #{policy_forward_discrete.1} parent=1 // pred_region
      _
    $region21: #{policy_forward_discrete.1} parent=1 // pred_fallthru
      _
    // Predicated region
    $region22: #{policy_forward_discrete.1} parent=1 // pred_check
      _
    $region23: #{policy_forward_discrete.1} parent=1 // pred_check_branch
      %45 = sbr.rel (0) target = $region25
    $region24: #{policy_forward_discrete.1} parent=1 // pred_region
      %s47 = ssub.s32 1024, 1024
      %48 = vsyncadd [#allocation5], %s47
      %s49 = sshll.u32 [#allocation6], 4
      %s50 = int_to_ptr.vmem [resolvable:$true] %s49
      %55 = dma.hbm_to_vmem [thread:$0]  %s5, 1024, %s50, [#allocation5], 64, 64, 4
    $region25: #{policy_forward_discrete.1} parent=1 // pred_fallthru
      _
    // Predicated region
    $region26: #{policy_forward_discrete.1} parent=1 // pred_check
      _
    $region27: #{policy_forward_discrete.1} parent=1 // pred_check_branch
      %57 = sbr.rel (0) target = $region29
    $region28: #{policy_forward_discrete.1} parent=1 // pred_region
      _
    $region29: #{policy_forward_discrete.1} parent=1 // pred_fallthru
      _
    // Predicated region
    $region30: #{policy_forward_discrete.1} parent=1 // pred_check
      _
    $region31: #{policy_forward_discrete.1} parent=1 // pred_check_branch
      %59 = sbr.rel (0) target = $region33
    $region32: #{policy_forward_discrete.1} parent=1 // pred_region
      %60 = dma.done [#allocation3], 1024
    $region33: #{policy_forward_discrete.1} parent=1 // pred_fallthru
      _
    // Predicated region
    $region34: #{policy_forward_discrete.1} parent=1 // pred_check
      _
    $region35: #{policy_forward_discrete.1} parent=1 // pred_check_branch
      %62 = sbr.rel (0) target = $region37
    $region36: #{policy_forward_discrete.1} parent=1 // pred_region
      %63 = dma.done [#allocation5], 1024
    $region37: #{policy_forward_discrete.1} parent=1 // pred_fallthru
      _
    // Predicated region
    $region38: #{policy_forward_discrete.1} parent=1 // pred_check
      _
    $region39: #{policy_forward_discrete.1} parent=1 // pred_check_branch
      %65 = sbr.rel (0) target = $region41
    $region40: #{policy_forward_discrete.1} parent=1 // pred_region
      %66 = dma.done [#allocation5], 1024
    $region41: #{policy_forward_discrete.1} parent=1 // pred_fallthru
      _
    %v68 = vld [vmem:[%s0] sm:$0xf]
    %v69 = vld [vmem:[#allocation2] sm:$0xf]
    %v70 = vld [vmem:[#allocation2 + $0x4] sm:$0xf]
    %v71 = vld [vmem:[#allocation2 + $0x8] sm:$0xf]
    %v72 = vld [vmem:[#allocation2 + $0xc] sm:$0xf]
    %v73 = vld [vmem:[#allocation2 + $0x10] sm:$0xf]
    %v74 = vld [vmem:[#allocation2 + $0x14] sm:$0xf]
    %v75 = vld [vmem:[#allocation2 + $0x18] sm:$0xf]
    %v76 = vld [vmem:[#allocation2 + $0x1c] sm:$0xf]
    %v77 = vld [vmem:[#allocation2 + $0x20] sm:$0xf]
    %v78 = vld [vmem:[#allocation2 + $0x24] sm:$0xf]
    %v79 = vld [vmem:[#allocation2 + $0x28] sm:$0xf]
    %v80 = vld [vmem:[#allocation2 + $0x2c] sm:$0xf]
    %v81 = vld [vmem:[#allocation2 + $0x30] sm:$0xf]
    %v82 = vld [vmem:[#allocation2 + $0x34] sm:$0xf]
    %v83 = vld [vmem:[#allocation2 + $0x38] sm:$0xf]
    %v84 = vld [vmem:[#allocation2 + $0x3c] sm:$0xf]
    %v85 = vld [vmem:[%s2] sm:$0x1]
    %v86 = vld [vmem:[#allocation4] sm:$0xf]
    %v87 = vld [vmem:[#allocation4 + $0x4] sm:$0xf]
    %v88 = vld [vmem:[#allocation4 + $0x8] sm:$0xf]
    %v89 = vld [vmem:[#allocation4 + $0xc] sm:$0xf]
    %v90 = vld [vmem:[#allocation4 + $0x10] sm:$0xf]
    %v91 = vld [vmem:[#allocation4 + $0x14] sm:$0xf]
    %v92 = vld [vmem:[#allocation4 + $0x18] sm:$0xf]
    %v93 = vld [vmem:[#allocation4 + $0x1c] sm:$0xf]
    %v94 = vld [vmem:[#allocation4 + $0x20] sm:$0xf]
    %v95 = vld [vmem:[#allocation4 + $0x24] sm:$0xf]
    %v96 = vld [vmem:[#allocation4 + $0x28] sm:$0xf]
    %v97 = vld [vmem:[#allocation4 + $0x2c] sm:$0xf]
    %v98 = vld [vmem:[#allocation4 + $0x30] sm:$0xf]
    %v99 = vld [vmem:[#allocation4 + $0x34] sm:$0xf]
    %v100 = vld [vmem:[#allocation4 + $0x38] sm:$0xf]
    %v101 = vld [vmem:[#allocation4 + $0x3c] sm:$0xf]
    %v102 = vld [vmem:[%s4] sm:$0x1]
    %v104 = vlaneseq
    %v105 = vshrl.u32 %v104, 7
    %v106 = vsub.s32 0, %v105
    %v107 = vrot.slane %v85, %v106
    %v125 = vunpack.c.l.b16 %v69
    %v126 = vunpack.c.l.b16 %v70
    %v127 = vunpack.c.l.b16 %v71
    %v128 = vunpack.c.l.b16 %v72
    %v129 = vunpack.c.l.b16 %v73
    %v130 = vunpack.c.l.b16 %v74
    %v131 = vunpack.c.l.b16 %v75
    %v132 = vunpack.c.l.b16 %v76
    %v133 = vunpack.c.l.b16 %v77
    %v134 = vunpack.c.l.b16 %v78
    %v135 = vunpack.c.l.b16 %v79
    %v136 = vunpack.c.l.b16 %v80
    %v137 = vunpack.c.l.b16 %v81
    %v138 = vunpack.c.l.b16 %v82
    %v139 = vunpack.c.l.b16 %v83
    %v140 = vunpack.c.l.b16 %v84
    %v141 = vpack.c.b16 %v126, %v125
    %v142 = vpack.c.b16 %v128, %v127
    %v143 = vpack.c.b16 %v130, %v129
    %v144 = vpack.c.b16 %v132, %v131
    %v145 = vpack.c.b16 %v134, %v133
    %v146 = vpack.c.b16 %v136, %v135
    %v147 = vpack.c.b16 %v138, %v137
    %v148 = vpack.c.b16 %v140, %v139
    %157 = vmatprep.subr.bf16.mxu0 0
    %158 = vmatpush1.bf16.msra.mxu0 %v148
    %159 = vmatprep.subr.bf16.mxu0 0
    %160 = vmatpush1.bf16.msra.mxu0 %v147
    %161 = vmatprep.subr.bf16.mxu0 0
    %162 = vmatpush1.bf16.msra.mxu0 %v146
    %163 = vmatprep.subr.bf16.mxu0 0
    %164 = vmatpush1.bf16.msra.mxu0 %v145
    %165 = vmatprep.subr.bf16.mxu0 0
    %166 = vmatpush1.bf16.msra.mxu0 %v144
    %167 = vmatprep.subr.bf16.mxu0 0
    %168 = vmatpush1.bf16.msra.mxu0 %v143
    %169 = vmatprep.subr.bf16.mxu0 0
    %170 = vmatpush1.bf16.msra.mxu0 %v142
    %171 = vmatprep.subr.bf16.mxu0 0
    %172 = vmatpush1.bf16.msra.mxu0 %v141
    %173 = vmatprep.subr.bf16.mxu0 0
    %174 = vmatpush2.bf16.msra.mxu0 0
    %175 = vmatprep.subr.bf16.mxu0 0
    %176 = vmatpush2.bf16.msra.mxu0 0
    %177 = vmatprep.subr.bf16.mxu0 0
    %178 = vmatpush2.bf16.msra.mxu0 0
    %179 = vmatprep.subr.bf16.mxu0 0
    %180 = vmatpush2.bf16.msra.mxu0 0
    %181 = vmatprep.subr.bf16.mxu0 0
    %182 = vmatpush2.bf16.msra.mxu0 0
    %183 = vmatprep.subr.bf16.mxu0 0
    %184 = vmatpush2.bf16.msra.mxu0 0
    %185 = vmatprep.subr.bf16.mxu0 0
    %186 = vmatpush2.bf16.msra.mxu0 0
    %187 = vmatprep.subr.bf16.mxu0 0
    %188 = vmatpush2.bf16.msra.mxu0 0
    %189 = vmatprep.mubr.bf16.mxu0 0
    %190 = vmatmul.mubr.bf16.gmra.mxu0 %v68
    %v191 = vpop.f32.mrf.mxu0
    %v192 = vadd.f32 %v107, %v191
    %v193 = vpop.f32.mrf.mxu0
    %v194 = vpop.f32.mrf.mxu0
    %v195 = vpop.f32.mrf.mxu0
    %196 = vdwg.mxu0
    %v197 = vtanh.pop %v192
    %v198 = vpack.c.bf16 %v197, %v197
    %v200 = vlaneseq
    %v201 = vshrl.u32 %v200, 7
    %v202 = vsub.s32 0, %v201
    %v203 = vrot.slane %v102, %v202
    %v221 = vunpack.c.l.b16 %v86
    %v222 = vunpack.c.l.b16 %v87
    %v223 = vunpack.c.l.b16 %v88
    %v224 = vunpack.c.l.b16 %v89
    %v225 = vunpack.c.l.b16 %v90
    %v226 = vunpack.c.l.b16 %v91
    %v227 = vunpack.c.l.b16 %v92
    %v228 = vunpack.c.l.b16 %v93
    %v229 = vunpack.c.l.b16 %v94
    %v230 = vunpack.c.l.b16 %v95
    %v231 = vunpack.c.l.b16 %v96
    %v232 = vunpack.c.l.b16 %v97
    %v233 = vunpack.c.l.b16 %v98
    %v234 = vunpack.c.l.b16 %v99
    %v235 = vunpack.c.l.b16 %v100
    %v236 = vunpack.c.l.b16 %v101
    %v237 = vpack.c.b16 %v222, %v221
    %v238 = vpack.c.b16 %v224, %v223
    %v239 = vpack.c.b16 %v226, %v225
    %v240 = vpack.c.b16 %v228, %v227
    %v241 = vpack.c.b16 %v230, %v229
    %v242 = vpack.c.b16 %v232, %v231
    %v243 = vpack.c.b16 %v234, %v233
    %v244 = vpack.c.b16 %v236, %v235
    %253 = vmatprep.subr.bf16.mxu0 0
    %254 = vmatpush1.bf16.msra.mxu0 %v244
    %255 = vmatprep.subr.bf16.mxu0 0
    %256 = vmatpush1.bf16.msra.mxu0 %v243
    %257 = vmatprep.subr.bf16.mxu0 0
    %258 = vmatpush1.bf16.msra.mxu0 %v242
    %259 = vmatprep.subr.bf16.mxu0 0
    %260 = vmatpush1.bf16.msra.mxu0 %v241
    %261 = vmatprep.subr.bf16.mxu0 0
    %262 = vmatpush1.bf16.msra.mxu0 %v240
    %263 = vmatprep.subr.bf16.mxu0 0
    %264 = vmatpush1.bf16.msra.mxu0 %v239
    %265 = vmatprep.subr.bf16.mxu0 0
    %266 = vmatpush1.bf16.msra.mxu0 %v238
    %267 = vmatprep.subr.bf16.mxu0 0
    %268 = vmatpush1.bf16.msra.mxu0 %v237
    %269 = vmatprep.subr.bf16.mxu0 0
    %270 = vmatpush2.bf16.msra.mxu0 0
    %271 = vmatprep.subr.bf16.mxu0 0
    %272 = vmatpush2.bf16.msra.mxu0 0
    %273 = vmatprep.subr.bf16.mxu0 0
    %274 = vmatpush2.bf16.msra.mxu0 0
    %275 = vmatprep.subr.bf16.mxu0 0
    %276 = vmatpush2.bf16.msra.mxu0 0
    %277 = vmatprep.subr.bf16.mxu0 0
    %278 = vmatpush2.bf16.msra.mxu0 0
    %279 = vmatprep.subr.bf16.mxu0 0
    %280 = vmatpush2.bf16.msra.mxu0 0
    %281 = vmatprep.subr.bf16.mxu0 0
    %282 = vmatpush2.bf16.msra.mxu0 0
    %283 = vmatprep.subr.bf16.mxu0 0
    %284 = vmatpush2.bf16.msra.mxu0 0
    %285 = vmatprep.mubr.bf16.mxu0 0
    %286 = vmatmul.mubr.bf16.gmra.mxu0 %v198
    %v287 = vpop.f32.mrf.mxu0
    %v288 = vadd.f32 %v203, %v287
    %v289 = vpop.f32.mrf.mxu0
    %v290 = vpop.f32.mrf.mxu0
    %v291 = vpop.f32.mrf.mxu0
    %292 = vdwg.mxu0
    %v293 = vtanh.pop %v288
    %v294 = vpack.c.bf16 %v293, %v293
    %v295 = vld [vmem:[#allocation6] sm:$0xf]
    %v296 = vld [vmem:[#allocation6 + $0x4] sm:$0xf]
    %v297 = vld [vmem:[#allocation6 + $0x8] sm:$0xf]
    %v298 = vld [vmem:[#allocation6 + $0xc] sm:$0xf]
    %v299 = vld [vmem:[#allocation6 + $0x10] sm:$0xf]
    %v300 = vld [vmem:[#allocation6 + $0x14] sm:$0xf]
    %v301 = vld [vmem:[#allocation6 + $0x18] sm:$0xf]
    %v302 = vld [vmem:[#allocation6 + $0x1c] sm:$0xf]
    %v303 = vld [vmem:[#allocation6 + $0x20] sm:$0xf]
    %v304 = vld [vmem:[#allocation6 + $0x24] sm:$0xf]
    %v305 = vld [vmem:[#allocation6 + $0x28] sm:$0xf]
    %v306 = vld [vmem:[#allocation6 + $0x2c] sm:$0xf]
    %v307 = vld [vmem:[#allocation6 + $0x30] sm:$0xf]
    %v308 = vld [vmem:[#allocation6 + $0x34] sm:$0xf]
    %v309 = vld [vmem:[#allocation6 + $0x38] sm:$0xf]
    %v310 = vld [vmem:[#allocation6 + $0x3c] sm:$0xf]
    %v311 = vld [vmem:[%s6] sm:$0x1]
    %v313 = vlaneseq
    %v314 = vshrl.u32 %v313, 7
    %v315 = vsub.s32 0, %v314
    %v316 = vrot.slane %v311, %v315
    %v334 = vunpack.c.l.b16 %v295
    %v335 = vunpack.c.l.b16 %v296
    %v336 = vunpack.c.l.b16 %v297
    %v337 = vunpack.c.l.b16 %v298
    %v338 = vunpack.c.l.b16 %v299
    %v339 = vunpack.c.l.b16 %v300
    %v340 = vunpack.c.l.b16 %v301
    %v341 = vunpack.c.l.b16 %v302
    %v342 = vunpack.c.l.b16 %v303
    %v343 = vunpack.c.l.b16 %v304
    %v344 = vunpack.c.l.b16 %v305
    %v345 = vunpack.c.l.b16 %v306
    %v346 = vunpack.c.l.b16 %v307
    %v347 = vunpack.c.l.b16 %v308
    %v348 = vunpack.c.l.b16 %v309
    %v349 = vunpack.c.l.b16 %v310
    %v350 = vpack.c.b16 %v335, %v334
    %v351 = vpack.c.b16 %v337, %v336
    %v352 = vpack.c.b16 %v339, %v338
    %v353 = vpack.c.b16 %v341, %v340
    %v354 = vpack.c.b16 %v343, %v342
    %v355 = vpack.c.b16 %v345, %v344
    %v356 = vpack.c.b16 %v347, %v346
    %v357 = vpack.c.b16 %v349, %v348
    %366 = vmatprep.subr.bf16.mxu0 0
    %367 = vmatpush1.bf16.msra.mxu0 %v357
    %368 = vmatprep.subr.bf16.mxu0 0
    %369 = vmatpush1.bf16.msra.mxu0 %v356
    %370 = vmatprep.subr.bf16.mxu0 0
    %371 = vmatpush1.bf16.msra.mxu0 %v355
    %372 = vmatprep.subr.bf16.mxu0 0
    %373 = vmatpush1.bf16.msra.mxu0 %v354
    %374 = vmatprep.subr.bf16.mxu0 0
    %375 = vmatpush1.bf16.msra.mxu0 %v353
    %376 = vmatprep.subr.bf16.mxu0 0
    %377 = vmatpush1.bf16.msra.mxu0 %v352
    %378 = vmatprep.subr.bf16.mxu0 0
    %379 = vmatpush1.bf16.msra.mxu0 %v351
    %380 = vmatprep.subr.bf16.mxu0 0
    %381 = vmatpush1.bf16.msra.mxu0 %v350
    %382 = vmatprep.subr.bf16.mxu0 0
    %383 = vmatpush2.bf16.msra.mxu0 0
    %384 = vmatprep.subr.bf16.mxu0 0
    %385 = vmatpush2.bf16.msra.mxu0 0
    %386 = vmatprep.subr.bf16.mxu0 0
    %387 = vmatpush2.bf16.msra.mxu0 0
    %388 = vmatprep.subr.bf16.mxu0 0
    %389 = vmatpush2.bf16.msra.mxu0 0
    %390 = vmatprep.subr.bf16.mxu0 0
    %391 = vmatpush2.bf16.msra.mxu0 0
    %392 = vmatprep.subr.bf16.mxu0 0
    %393 = vmatpush2.bf16.msra.mxu0 0
    %394 = vmatprep.subr.bf16.mxu0 0
    %395 = vmatpush2.bf16.msra.mxu0 0
    %396 = vmatprep.subr.bf16.mxu0 0
    %397 = vmatpush2.bf16.msra.mxu0 0
    %398 = vmatprep.mubr.bf16.mxu0 0
    %399 = vmatmul.mubr.bf16.gmra.mxu0 %v294
    %v400 = vpop.f32.mrf.mxu0
    %v401 = vadd.f32 %v316, %v400
    %v402 = vpop.f32.mrf.mxu0
    %v403 = vpop.f32.mrf.mxu0
    %v404 = vpop.f32.mrf.mxu0
    %405 = vdwg.mxu0
    %406 = vmax.xlane.f32.xlu0 %v401
    %v407 = vpop.xlane.xlu0 %406
    %v408 = vsub.f32 %v401, %v407
    %v409 = vmul.f32 %v408, 1.442695
    %v410 = vpow.pop %v409
    %411 = vadd.xlane.f32.xlu0 %v410
    %v412 = vpop.xlane.xlu0 %411
    %v413 = vrcp.pop %v412
    %v414 = vmul.f32 %v410, %v413
    %415 = vst [vmem:[%s7] sm:$0xff] %v414
    // Predicated region
    $region42: #{policy_forward_discrete.1} parent=1 // pred_check
      _
    $region43: #{policy_forward_discrete.1} parent=1 // pred_check_branch
      %417 = sbr.rel (0) target = $region45
    $region44: #{policy_forward_discrete.1} parent=1 // pred_region
      _
    $region45: #{policy_forward_discrete.1} parent=1 // pred_fallthru
      _
    // Predicated region
    $region46: #{policy_forward_discrete.1} parent=1 // pred_check
      _
    $region47: #{policy_forward_discrete.1} parent=1 // pred_check_branch
      %419 = sbr.rel (0) target = $region49
    $region48: #{policy_forward_discrete.1} parent=1 // pred_region
      _
    $region49: #{policy_forward_discrete.1} parent=1 // pred_fallthru
      _
    %420 = vsyncpa [#allocation3], 1
    %421 = vsyncpa [#allocation5], 1

</llo_original>
